<compile_context>
chip_gen: v6e
topology: v6e:2x2x1
jax: 0.10.0
libtpu: 0.0.40
codegen_flags: <defaults>
</compile_context>

<pallas_src>
import functools

import jax
import jax.numpy as jnp
from jax.experimental import pallas as pl
from jax.experimental.pallas import tpu as pltpu


def _explainn_kernel(x2_ref, wc_ref, w1_ref, w2_ref, bias_ref, out_ref,
                     *, B, pool, P, U, FC):
    # (1) grouped Conv1d(U*4, U, F, groups=U) + BN1 (folded) + bias, as a single
    #     block-diagonal im2col GEMM.  Rows = (batch, in-window offset j),
    #     columns = (pool window p, unit u)  ->  (B*pool, P*U), lane-dense.
    conv = jnp.dot(x2_ref[...], wc_ref[...], preferred_element_type=jnp.float32)
    a = jnp.exp(conv)                                    # Exp()

    # (2) MaxPool1d(pool, stride): one reduce over the in-window offset axis.
    pooled = jnp.max(a.reshape(B, pool, P * U), axis=1)  # (B, P*U), (p,u)-ordered

    bias = bias_ref[...]                                 # (1, U*FC + 2U + 1)
    nb1 = U * FC

    # (3) grouped Conv1d(P*U, FC*U, 1, groups=U) + BN2 (folded) + ReLU
    #     as one block-diagonal GEMM.  Dropout is the identity at inference.
    h = jnp.dot(pooled, w1_ref[...], preferred_element_type=jnp.float32) + bias[:, :nb1]
    h = jnp.maximum(h, 0.0)

    # (4) grouped Conv1d(FC*U, U, 1, groups=U) + BN3 (folded) + ReLU.
    y = jnp.dot(h, w2_ref[...], preferred_element_type=jnp.float32) + bias[:, nb1:nb1 + U]
    y = jnp.maximum(y, 0.0)

    # (5) Linear(U, 1) + Sigmoid; final weight row is packed in the bias vector.
    wf = bias[:, nb1 + U:nb1 + 2 * U]                    # (1, U)
    bf = bias[:, nb1 + 2 * U:nb1 + 2 * U + 1]            # (1, 1)
    logits = jnp.sum(y * wf, axis=1, keepdims=True) + bf
    out_ref[...] = jax.nn.sigmoid(logits)                # (B, 1)


def fold_params(params):
    """Host-side, one-time: fold eval-mode BN into weights and build block-diag GEMM
    operands + the packed bias vector consumed by the kernel."""
    (wc, bc, s1, t1, W1t, b1, s2, t2, W2, b2, s3, t3, Wf, bf) = params
    F, D, U = wc.shape
    P, FC = W1t.shape[1], W1t.shape[2]
    FD = F * D

    # Conv weights (rows ordered f*D+d) with BN1 scale folded; bias row folded too.
    wc_f = wc.reshape(FD, U) * s1                         # (FD, U)
    bc_f = bc * s1 + t1                                   # (1, U)
    # Block-diagonal over pool windows so conv GEMM columns come out in (p, u) order.
    eyeP = jnp.eye(P, dtype=jnp.float32)
    wc_blk = jnp.einsum('ku,pq->pkqu', wc_f, eyeP).reshape(P * FD, P * U)
    wc_aug = jnp.concatenate([wc_blk, jnp.tile(bc_f, (1, P))], axis=0)   # (P*FD+1, P*U)

    # FC1 (grouped 1x1 conv) with BN2 folded; rows in (p, u) order, cols (u, fc).
    eyeU = jnp.eye(U, dtype=jnp.float32)
    W1_f = W1t * s2[:, None, :]                           # (U, P, FC)
    w1_blk = jnp.einsum('upf,uv->puvf', W1_f, eyeU).reshape(P * U, U * FC)
    b1_f = (b1 * s2 + t2).reshape(1, U * FC)

    # FC2 (grouped 1x1 conv) with BN3 folded; rows (u, fc), cols = unit.
    W2_f = W2[:, :, 0] * s3.reshape(U, 1)                 # (U, FC)
    w2_blk = jnp.einsum('uf,uv->ufv', W2_f, eyeU).reshape(U * FC, U)
    b2_f = b2 * s3 + t3                                   # (1, U)

    # Pack every remaining small vector into a single operand.
    bias_pack = jnp.concatenate(
        [b1_f, b2_f, Wf.reshape(1, U), bf.reshape(1, 1)], axis=1)        # (1, U*FC+2U+1)
    return wc_aug, w1_blk, w2_blk, bias_pack


def explainn_forward(x, folded, *, filt, pool, stride):
    wc_aug, w1_blk, w2_blk, bias_pack = folded
    B, L, D = x.shape
    F = filt
    FD = F * D
    Lp = L - F + 1
    U = w2_blk.shape[1]
    FC = w2_blk.shape[0] // U
    P = w1_blk.shape[0] // U

    # Wrapper-side (XLA) im2col + pool-window gather:
    #   rows = (batch b, in-window offset j), cols = (pool window p, tap f, feature d),
    #   plus a trailing ones column for the folded conv bias.
    win = jnp.stack([x[:, f:f + Lp, :] for f in range(F)], axis=2).reshape(B, Lp, FD)
    pos = jnp.arange(P)[:, None] * stride + jnp.arange(pool)[None, :]    # (P, pool)
    xsel = win[:, pos, :]                                                # (B, P, pool, FD)
    x2 = jnp.transpose(xsel, (0, 2, 1, 3)).reshape(B * pool, P * FD)
    x2 = jnp.concatenate([x2, jnp.ones((B * pool, 1), x2.dtype)], axis=1)

    kernel = functools.partial(_explainn_kernel, B=B, pool=pool, P=P, U=U, FC=FC)
    vmem = pl.BlockSpec(memory_space=pltpu.MemorySpace.VMEM)
    return pl.pallas_call(
        kernel,
        out_shape=jax.ShapeDtypeStruct((B, 1), jnp.float32),
        in_specs=[vmem] * 5,
        out_specs=vmem,
    )(x2, wc_aug, w1_blk, w2_blk, bias_pack)


def make_params(key, *, U, D, F, P, FC, eps=1e-5):
    """Deterministic synthetic parameters; BN layers expressed as per-channel
    scale/shift (eval mode folding of gamma/beta/mean/var)."""
    ks = iter(jax.random.split(key, 24))
    nxt = lambda: next(ks)

    # Conv1d(U*4, U, F, groups=U): torch weight layout (U, D, F), bias (U,)
    Wc_t = 0.3 * jax.random.normal(nxt(), (U, D, F), jnp.float32)
    bc = 0.1 * jax.random.normal(nxt(), (U,), jnp.float32)

    def fold_bn(shape):
        g = 1.0 + 0.2 * jax.random.normal(nxt(), shape, jnp.float32)
        b = 0.1 * jax.random.normal(nxt(), shape, jnp.float32)
        m = 0.1 * jax.random.normal(nxt(), shape, jnp.float32)
        v = jax.random.uniform(nxt(), shape, jnp.float32, 0.5, 1.5)
        s = g / jnp.sqrt(v + eps)
        return s, b - m * s

    s1, t1 = fold_bn((U,))                    # BatchNorm1d(U)

    W1t = 0.3 * jax.random.normal(nxt(), (U, P, FC), jnp.float32)   # Conv1d(P*U, FC*U, 1, groups=U)
    b1 = 0.1 * jax.random.normal(nxt(), (U, FC), jnp.float32)
    s2, t2 = fold_bn((U, FC))                 # BatchNorm1d(FC*U)

    W2 = 0.3 * jax.random.normal(nxt(), (U, FC, 1), jnp.float32)    # Conv1d(FC*U, U, 1, groups=U)
    b2 = 0.1 * jax.random.normal(nxt(), (U,), jnp.float32)
    s3, t3 = fold_bn((U,))                    # BatchNorm1d(U)

    Wf = 0.3 * jax.random.normal(nxt(), (U, 1), jnp.float32)        # Linear(U, 1)
    bf = 0.1 * jax.random.normal(nxt(), (1, 1), jnp.float32)

    wc = jnp.transpose(Wc_t, (2, 1, 0))       # (F, D, U) for im2col GEMMs
    return (
        wc, bc.reshape(1, U), s1.reshape(1, U), t1.reshape(1, U),
        W1t, b1, s2, t2,
        W2, b2.reshape(1, U), s3.reshape(1, U), t3.reshape(1, U),
        Wf, bf,
    )


def reference(x, params, *, filt, pool, stride):
    """Plain-JAX reference of the same eval-mode forward pass."""
    (wc, bc, s1, t1, W1t, b1, s2, t2, W2, b2, s3, t3, Wf, bf) = params
    B, L, D = x.shape
    F = filt
    P = W1t.shape[1]
    Lp = L - F + 1
    windows = jnp.stack([x[:, f:f + Lp, :] for f in range(F)], axis=-1)   # (B, Lp, D, F)
    conv = jnp.einsum('bldf,fdu->blu', windows, wc) + bc[None]
    a = jnp.exp(conv * s1[None] + t1[None])
    pooled = jnp.stack(
        [a[:, p * stride:p * stride + pool, :].max(axis=1) for p in range(P)], axis=1)
    h = jnp.einsum('bpu,upk->buk', pooled, W1t) + b1[None]
    h = jnp.maximum(h * s2[None] + t2[None], 0.0)
    y = jnp.einsum('buk,uko->bu', h, W2) + b2
    y = jnp.maximum(y * s3 + t3, 0.0)
    return jax.nn.sigmoid(y @ Wf + bf)


if __name__ == "__main__":
    # ExplaiNN(num_units=4, conv_filter_size=5, max_pool_size=4, max_pool_stride=4,
    #          fc_size=8, dropout_rate=0.3, input_length=32, input_dim=4)
    B, L, D = 2, 32, 4
    U, F, M, S, FC = 4, 5, 4, 4, 8
    P = int((L - (F - 1) - (M - 1) - 1) / S) + 1       # post_pool_size = 7
    # Dropout(dropout_rate) is the identity at inference time; nothing to compute.

    key = jax.random.PRNGKey(0)
    kx, kp = jax.random.split(key)
    x = jax.random.normal(kx, (B, L, D), jnp.float32)
    params = make_params(kp, U=U, D=D, F=F, P=P, FC=FC)
    folded = fold_params(params)               # one-time host-side weight prep

    out = explainn_forward(x, folded, filt=F, pool=M, stride=S)
    out = jax.block_until_ready(out)

    ref = reference(x, params, filt=F, pool=M, stride=S)
    assert out.shape == (B, 1), out.shape
    assert jnp.allclose(out, ref, atol=1e-4, rtol=1e-4), (out, ref)
    print("KERNEL_OK")
</pallas_src>

<mosaic_0001>
module attributes {stable_mosaic.version = 11 : i64} {
  func.func @_explainn_kernel(%arg0: memref<8x141xf32, #tpu.memory_space<vmem>>, %arg1: memref<141x28xf32, #tpu.memory_space<vmem>>, %arg2: memref<28x32xf32, #tpu.memory_space<vmem>>, %arg3: memref<32x4xf32, #tpu.memory_space<vmem>>, %arg4: memref<1x41xf32, #tpu.memory_space<vmem>>, %arg5: memref<2x1xf32, #tpu.memory_space<vmem>>) attributes {dimension_semantics = [], scalar_prefetch = 0 : i64, scratch_operands = 0 : i64, tpu.core_type = #tpu.core_type<tc>} {
    %c0 = arith.constant 0 : index
    %c0_0 = arith.constant 0 : index
    %0 = vector.load %arg0[%c0, %c0_0] : memref<8x141xf32, #tpu.memory_space<vmem>>, vector<8x141xf32>
    %c0_1 = arith.constant 0 : index
    %c0_2 = arith.constant 0 : index
    %1 = vector.load %arg1[%c0_1, %c0_2] : memref<141x28xf32, #tpu.memory_space<vmem>>, vector<141x28xf32>
    %cst = arith.constant dense<0.000000e+00> : vector<8x28xf32>
    %2 = tpu.matmul %0, %1, %cst {dimension_numbers = #tpu.dot_dimension_numbers<[1], [0], [0], [1], [0, 0, 1, 1], [], []>} : vector<8x141xf32>, vector<141x28xf32>, vector<8x28xf32> -> vector<8x28xf32>
    %3 = math.exp %2 : vector<8x28xf32>
    %4 = vector.shape_cast %3 : vector<8x28xf32> to vector<2x4x28xf32>
    %cst_3 = arith.constant dense<0xFF800000> : vector<2x28xf32>
    %5 = vector.multi_reduction <maximumf>, %4, %cst_3 [1] : vector<2x4x28xf32> to vector<2x28xf32>
    %c0_4 = arith.constant 0 : index
    %c0_5 = arith.constant 0 : index
    %6 = vector.load %arg4[%c0_4, %c0_5] : memref<1x41xf32, #tpu.memory_space<vmem>>, vector<1x41xf32>
    %c0_6 = arith.constant 0 : index
    %c0_7 = arith.constant 0 : index
    %7 = vector.load %arg2[%c0_6, %c0_7] : memref<28x32xf32, #tpu.memory_space<vmem>>, vector<28x32xf32>
    %cst_8 = arith.constant dense<0.000000e+00> : vector<2x32xf32>
    %8 = tpu.matmul %5, %7, %cst_8 {dimension_numbers = #tpu.dot_dimension_numbers<[1], [0], [0], [1], [0, 0, 1, 1], [], []>} : vector<2x28xf32>, vector<28x32xf32>, vector<2x32xf32> -> vector<2x32xf32>
    %9 = vector.extract_strided_slice %6 {offsets = [0, 0], sizes = [1, 32], strides = [1, 1]} : vector<1x41xf32> to vector<1x32xf32>
    %10 = vector.broadcast %9 : vector<1x32xf32> to vector<2x32xf32>
    %11 = arith.addf %8, %10 : vector<2x32xf32>
    %cst_9 = arith.constant 0.000000e+00 : f32
    %12 = vector.broadcast %cst_9 : f32 to vector<2x32xf32>
    %13 = arith.maximumf %11, %12 : vector<2x32xf32>
    %c0_10 = arith.constant 0 : index
    %c0_11 = arith.constant 0 : index
    %14 = vector.load %arg3[%c0_10, %c0_11] : memref<32x4xf32, #tpu.memory_space<vmem>>, vector<32x4xf32>
    %cst_12 = arith.constant dense<0.000000e+00> : vector<2x4xf32>
    %15 = tpu.matmul %13, %14, %cst_12 {dimension_numbers = #tpu.dot_dimension_numbers<[1], [0], [0], [1], [0, 0, 1, 1], [], []>} : vector<2x32xf32>, vector<32x4xf32>, vector<2x4xf32> -> vector<2x4xf32>
    %16 = vector.extract_strided_slice %6 {offsets = [0, 32], sizes = [1, 4], strides = [1, 1]} : vector<1x41xf32> to vector<1x4xf32>
    %17 = vector.broadcast %16 : vector<1x4xf32> to vector<2x4xf32>
    %18 = arith.addf %15, %17 : vector<2x4xf32>
    %cst_13 = arith.constant 0.000000e+00 : f32
    %19 = vector.broadcast %cst_13 : f32 to vector<2x4xf32>
    %20 = arith.maximumf %18, %19 : vector<2x4xf32>
    %21 = vector.extract_strided_slice %6 {offsets = [0, 36], sizes = [1, 4], strides = [1, 1]} : vector<1x41xf32> to vector<1x4xf32>
    %22 = vector.extract_strided_slice %6 {offsets = [0, 40], sizes = [1, 1], strides = [1, 1]} : vector<1x41xf32> to vector<1x1xf32>
    %23 = vector.broadcast %21 : vector<1x4xf32> to vector<2x4xf32>
    %24 = arith.mulf %20, %23 : vector<2x4xf32>
    %cst_14 = arith.constant dense<0.000000e+00> : vector<2xf32>
    %25 = vector.multi_reduction <add>, %24, %cst_14 [1] : vector<2x4xf32> to vector<2xf32>
    %26 = vector.shape_cast %25 : vector<2xf32> to vector<2x1xf32>
    %27 = vector.broadcast %22 : vector<1x1xf32> to vector<2x1xf32>
    %28 = arith.addf %26, %27 : vector<2x1xf32>
    %29 = arith.negf %28 : vector<2x1xf32>
    %30 = math.exp %29 : vector<2x1xf32>
    %cst_15 = arith.constant 1.000000e+00 : f32
    %31 = vector.broadcast %cst_15 : f32 to vector<2x1xf32>
    %32 = arith.addf %31, %30 : vector<2x1xf32>
    %33 = arith.divf %31, %32 : vector<2x1xf32>
    %c0_16 = arith.constant 0 : index
    %c0_17 = arith.constant 0 : index
    %34 = vector.load %arg5[%c0_16, %c0_17] : memref<2x1xf32, #tpu.memory_space<vmem>>, vector<2x1xf32>
    tpu.vector_store %arg5[%c0_16, %c0_17], %33 {strides = array<i32>} : memref<2x1xf32, #tpu.memory_space<vmem>>, vector<2x1xf32>,
    return
  }
}

</mosaic_0001>

<llo_original>
// kernel: tpu_custom_call.1
$region0: #{tpu_custom_call.1}
  #allocation0 [shape = 'u32[]', space=smem, size = 0x4, offset = 0x4, fixed_abs, tag = 'smem constant byte address 0x4 - core index']
  #allocation1 [shape = 'u32[144,128]{1,0:T(1,128)}', space=vmem, size = 0x12000, scoped, tag = 'internal scratch']
  %s0 = inlined_call_operand.vmem [shape: f32[8,141], index: 0, kind: input, shape index: {}]
  %s1 = inlined_call_operand.vmem [shape: f32[141,28], index: 1, kind: input, shape index: {}]
  %s2 = inlined_call_operand.vmem [shape: f32[28,32], index: 2, kind: input, shape index: {}]
  %s3 = inlined_call_operand.vmem [shape: f32[32,4], index: 3, kind: input, shape index: {}]
  %s4 = inlined_call_operand.vmem [shape: f32[1,41], index: 4, kind: input, shape index: {}]
  %s5 = inlined_call_operand.vmem [shape: f32[2,1], index: 5, kind: output, shape index: {}]
  %s6 = sld [smem:[#allocation0]]
  $region30: #{tpu_custom_call.1} parent=0
    _
  %s8 = ssub.s32 1, %s6
  %s9 = scalar_select 0, %s8, %s6
  // Predicated region
  $region2: #{tpu_custom_call.1} parent=0 // pred_check
    _
  $region3: #{tpu_custom_call.1} parent=0 // pred_check_branch
    %11 = sbr.rel (0) target = $region5
  $region4: #{tpu_custom_call.1} parent=0 // pred_region
    _
  $region5: #{tpu_custom_call.1} parent=0 // pred_fallthru
    _
  // Predicated region
  $region6: #{tpu_custom_call.1} parent=0 // pred_check
    _
  $region7: #{tpu_custom_call.1} parent=0 // pred_check_branch
    %13 = sbr.rel (0) target = $region9
  $region8: #{tpu_custom_call.1} parent=0 // pred_region
    _
  $region9: #{tpu_custom_call.1} parent=0 // pred_fallthru
    _
  // Predicated region
  $region10: #{tpu_custom_call.1} parent=0 // pred_check
    _
  $region11: #{tpu_custom_call.1} parent=0 // pred_check_branch
    %15 = sbr.rel (0) target = $region13
  $region12: #{tpu_custom_call.1} parent=0 // pred_region
    _
  $region13: #{tpu_custom_call.1} parent=0 // pred_fallthru
    _
  // Predicated region
  $region14: #{tpu_custom_call.1} parent=0 // pred_check
    _
  $region15: #{tpu_custom_call.1} parent=0 // pred_check_branch
    %17 = sbr.rel (0) target = $region17
  $region16: #{tpu_custom_call.1} parent=0 // pred_region
    _
  $region17: #{tpu_custom_call.1} parent=0 // pred_fallthru
    _
  // Predicated region
  $region18: #{tpu_custom_call.1} parent=0 // pred_check
    _
  $region19: #{tpu_custom_call.1} parent=0 // pred_check_branch
    %19 = sbr.rel (0) target = $region21
  $region20: #{tpu_custom_call.1} parent=0 // pred_region
    _
  $region21: #{tpu_custom_call.1} parent=0 // pred_fallthru
    _
  %v20 = vld [vmem:[%s0] sm:$0xff]
  %v21 = vld [vmem:[%s0 + $0x8] sm:$0xff]
  %v22 = vld [vmem:[%s1] sm:$0xff]
  %v23 = vld [vmem:[%s1 + $0x8] sm:$0xff]
  %v24 = vld [vmem:[%s1 + $0x10] sm:$0xff]
  %v25 = vld [vmem:[%s1 + $0x18] sm:$0xff]
  %v26 = vld [vmem:[%s1 + $0x20] sm:$0xff]
  %v27 = vld [vmem:[%s1 + $0x28] sm:$0xff]
  %v28 = vld [vmem:[%s1 + $0x30] sm:$0xff]
  %v29 = vld [vmem:[%s1 + $0x38] sm:$0xff]
  %v30 = vld [vmem:[%s1 + $0x40] sm:$0xff]
  %v31 = vld [vmem:[%s1 + $0x48] sm:$0xff]
  %v32 = vld [vmem:[%s1 + $0x50] sm:$0xff]
  %v33 = vld [vmem:[%s1 + $0x58] sm:$0xff]
  %v34 = vld [vmem:[%s1 + $0x60] sm:$0xff]
  %v35 = vld [vmem:[%s1 + $0x68] sm:$0xff]
  %v36 = vld [vmem:[%s1 + $0x70] sm:$0xff]
  %v37 = vld [vmem:[%s1 + $0x78] sm:$0xff]
  %v38 = vld [vmem:[%s1 + $0x80] sm:$0xff]
  %v39 = vld [vmem:[%s1 + $0x88] sm:$0x1f]
  %vm40 = vcmask 105472
  %v42 = vsel %vm40, %v21, 0
  %vm44 = vcmask 1044480
  %v46 = vsel %vm44, %v39, 0
  %48 = vmatprep.subr.mxu0 0.0
  %49 = vmatpush1.msra.mxu0 %v37
  %50 = vmatprep.subr.mxu0 0.0
  %51 = vmatpush1.msra.mxu0 %v36
  %52 = vmatprep.subr.mxu0 0.0
  %53 = vmatpush1.msra.mxu0 %v35
  %54 = vmatprep.subr.mxu0 0.0
  %55 = vmatpush1.msra.mxu0 %v34
  %56 = vmatprep.subr.mxu0 0.0
  %57 = vmatpush1.msra.mxu0 %v33
  %58 = vmatprep.subr.mxu0 0.0
  %59 = vmatpush1.msra.mxu0 %v32
  %60 = vmatprep.subr.mxu0 0.0
  %61 = vmatpush1.msra.mxu0 %v31
  %62 = vmatprep.subr.mxu0 0.0
  %63 = vmatpush1.msra.mxu0 %v30
  %64 = vmatprep.subr.mxu0 0.0
  %65 = vmatpush1.msra.mxu0 %v29
  %66 = vmatprep.subr.mxu0 0.0
  %67 = vmatpush1.msra.mxu0 %v28
  %68 = vmatprep.subr.mxu0 0.0
  %69 = vmatpush1.msra.mxu0 %v27
  %70 = vmatprep.subr.mxu0 0.0
  %71 = vmatpush1.msra.mxu0 %v26
  %72 = vmatprep.subr.mxu0 0.0
  %73 = vmatpush1.msra.mxu0 %v25
  %74 = vmatprep.subr.mxu0 0.0
  %75 = vmatpush1.msra.mxu0 %v24
  %76 = vmatprep.subr.mxu0 0.0
  %77 = vmatpush1.msra.mxu0 %v23
  %78 = vmatprep.subr.mxu0 0.0
  %79 = vmatpush1.msra.mxu0 %v22
  %80 = vmatprep.subr.mxu0 0.0
  %81 = vmatpush2.msra.mxu0 0.0
  %82 = vmatprep.subr.mxu0 0.0
  %83 = vmatpush2.msra.mxu0 0.0
  %84 = vmatprep.subr.mxu0 0.0
  %85 = vmatpush2.msra.mxu0 0.0
  %86 = vmatprep.subr.mxu0 0.0
  %87 = vmatpush2.msra.mxu0 0.0
  %88 = vmatprep.subr.mxu0 0.0
  %89 = vmatpush2.msra.mxu0 0.0
  %90 = vmatprep.subr.mxu0 0.0
  %91 = vmatpush2.msra.mxu0 0.0
  %92 = vmatprep.subr.mxu0 0.0
  %93 = vmatpush2.msra.mxu0 0.0
  %94 = vmatprep.subr.mxu0 0.0
  %95 = vmatpush2.msra.mxu0 0.0
  %96 = vmatprep.subr.mxu0 0.0
  %97 = vmatpush2.msra.mxu0 0.0
  %98 = vmatprep.subr.mxu0 0.0
  %99 = vmatpush2.msra.mxu0 0.0
  %100 = vmatprep.subr.mxu0 0.0
  %101 = vmatpush2.msra.mxu0 0.0
  %102 = vmatprep.subr.mxu0 0.0
  %103 = vmatpush2.msra.mxu0 0.0
  %104 = vmatprep.subr.mxu0 0.0
  %105 = vmatpush2.msra.mxu0 0.0
  %106 = vmatprep.subr.mxu0 0.0
  %107 = vmatpush2.msra.mxu0 0.0
  %108 = vmatprep.subr.mxu0 0.0
  %109 = vmatpush2.msra.mxu0 %v46
  %110 = vmatprep.subr.mxu0 0.0
  %111 = vmatpush2.msra.mxu0 %v38
  %112 = vmatprep.mubr.f32.mxu0 %v42
  %113 = vmatmul.mubr.f32.gmra.mxu0 %v20
  %v114 = vpop.f32.mrf.mxu0
  %v115 = vadd.f32 0.0, %v114
  %v116 = vpop.f32.mrf.mxu0
  %117 = vdwg.mxu0
  %v118 = vmul.f32 %v115, 1.442695
  %v119 = vpow.pop %v118
  %v121 = vcombine.high %v119, %v119
  %vm123 = vcmask 224256
  %v124 = vsel %vm123, %v119, -inf
  %v125 = vrot.slane %v124, 4
  %v126 = vmax.f32 %v124, %v125
  %v127 = vrot.slane %v126, 2
  %v128 = vmax.f32 %v126, %v127
  %v129 = vrot.slane %v128, 1
  %v130 = vmax.f32 %v128, %v129
  %v131 = vsel %vm123, %v121, -inf
  %v132 = vrot.slane %v131, 4
  %v133 = vmax.f32 %v131, %v132
  %v134 = vrot.slane %v133, 2
  %v135 = vmax.f32 %v133, %v134
  %v136 = vrot.slane %v135, 1
  %v137 = vmax.f32 %v135, %v136
  %v138 = vld [vmem:[%s4] sm:$0x1]
  %v139 = vld [vmem:[%s2] sm:$0xff]
  %v140 = vld [vmem:[%s2 + $0x8] sm:$0xff]
  %v141 = vld [vmem:[%s2 + $0x10] sm:$0xff]
  %v142 = vld [vmem:[%s2 + $0x18] sm:$0xf]
  %v144 = vlaneseq
  %v145 = vshrl.u32 %v144, 7
  %v146 = vsub.s32 0, %v145
  %v147 = vrot.slane %v138, %v146
  %vm151 = vcmask 1041409
  %v152 = vsel %vm151, %v137, %v130
  %vm153 = vcmask 228352
  %v154 = vsel %vm153, %v152, 0
  %vm156 = vcmask 1043456
  %v158 = vsel %vm156, %v142, 0
  %160 = vmatprep.subr.mxu0 0.0
  %161 = vmatpush1.msra.mxu0 0.0
  %162 = vmatprep.subr.mxu0 0.0
  %163 = vmatpush1.msra.mxu0 0.0
  %164 = vmatprep.subr.mxu0 0.0
  %165 = vmatpush1.msra.mxu0 0.0
  %166 = vmatprep.subr.mxu0 0.0
  %167 = vmatpush1.msra.mxu0 0.0
  %168 = vmatprep.subr.mxu0 0.0
  %169 = vmatpush1.msra.mxu0 0.0
  %170 = vmatprep.subr.mxu0 0.0
  %171 = vmatpush1.msra.mxu0 0.0
  %172 = vmatprep.subr.mxu0 0.0
  %173 = vmatpush1.msra.mxu0 0.0
  %174 = vmatprep.subr.mxu0 0.0
  %175 = vmatpush1.msra.mxu0 0.0
  %176 = vmatprep.subr.mxu0 0.0
  %177 = vmatpush1.msra.mxu0 0.0
  %178 = vmatprep.subr.mxu0 0.0
  %179 = vmatpush1.msra.mxu0 0.0
  %180 = vmatprep.subr.mxu0 0.0
  %181 = vmatpush1.msra.mxu0 0.0
  %182 = vmatprep.subr.mxu0 0.0
  %183 = vmatpush1.msra.mxu0 0.0
  %184 = vmatprep.subr.mxu0 0.0
  %185 = vmatpush1.msra.mxu0 %v158
  %186 = vmatprep.subr.mxu0 0.0
  %187 = vmatpush1.msra.mxu0 %v141
  %188 = vmatprep.subr.mxu0 0.0
  %189 = vmatpush1.msra.mxu0 %v140
  %190 = vmatprep.subr.mxu0 0.0
  %191 = vmatpush1.msra.mxu0 %v139
  %192 = vmatprep.subr.mxu0 0.0
  %193 = vmatpush2.msra.mxu0 0.0
  %194 = vmatprep.subr.mxu0 0.0
  %195 = vmatpush2.msra.mxu0 0.0
  %196 = vmatprep.subr.mxu0 0.0
  %197 = vmatpush2.msra.mxu0 0.0
  %198 = vmatprep.subr.mxu0 0.0
  %199 = vmatpush2.msra.mxu0 0.0
  %200 = vmatprep.subr.mxu0 0.0
  %201 = vmatpush2.msra.mxu0 0.0
  %202 = vmatprep.subr.mxu0 0.0
  %203 = vmatpush2.msra.mxu0 0.0
  %204 = vmatprep.subr.mxu0 0.0
  %205 = vmatpush2.msra.mxu0 0.0
  %206 = vmatprep.subr.mxu0 0.0
  %207 = vmatpush2.msra.mxu0 0.0
  %208 = vmatprep.subr.mxu0 0.0
  %209 = vmatpush2.msra.mxu0 0.0
  %210 = vmatprep.subr.mxu0 0.0
  %211 = vmatpush2.msra.mxu0 0.0
  %212 = vmatprep.subr.mxu0 0.0
  %213 = vmatpush2.msra.mxu0 0.0
  %214 = vmatprep.subr.mxu0 0.0
  %215 = vmatpush2.msra.mxu0 0.0
  %216 = vmatprep.subr.mxu0 0.0
  %217 = vmatpush2.msra.mxu0 0.0
  %218 = vmatprep.subr.mxu0 0.0
  %219 = vmatpush2.msra.mxu0 0.0
  %220 = vmatprep.subr.mxu0 0.0
  %221 = vmatpush2.msra.mxu0 0.0
  %222 = vmatprep.subr.mxu0 0.0
  %223 = vmatpush2.msra.mxu0 0.0
  %224 = vmatprep.mubr.f32.mxu0 0.0
  %225 = vmatmul.mubr.f32.gmra.mxu0 %v154
  %v226 = vpop.f32.mrf.mxu0
  %v227 = vadd.f32 %v147, %v226
  %v228 = vpop.f32.mrf.mxu0
  %229 = vdwg.mxu0
  %v230 = vmax.f32 %v227, 0.0
  %v231 = vld [vmem:[%s3] sm:$0xff]
  %v232 = vld [vmem:[%s3 + $0x8] sm:$0xff]
  %v233 = vld [vmem:[%s3 + $0x10] sm:$0xff]
  %v234 = vld [vmem:[%s3 + $0x18] sm:$0xff]
  %235 = vrot.lane.b32.xlu0 %v147, 96
  %v236 = vpop.permute.xlu0 %235
  %vm238 = vcmask 261120
  %v240 = vsel %vm238, %v230, 0
  %242 = vmatprep.subr.mxu0 0.0
  %243 = vmatpush1.msra.mxu0 0.0
  %244 = vmatprep.subr.mxu0 0.0
  %245 = vmatpush1.msra.mxu0 0.0
  %246 = vmatprep.subr.mxu0 0.0
  %247 = vmatpush1.msra.mxu0 0.0
  %248 = vmatprep.subr.mxu0 0.0
  %249 = vmatpush1.msra.mxu0 0.0
  %250 = vmatprep.subr.mxu0 0.0
  %251 = vmatpush1.msra.mxu0 0.0
  %252 = vmatprep.subr.mxu0 0.0
  %253 = vmatpush1.msra.mxu0 0.0
  %254 = vmatprep.subr.mxu0 0.0
  %255 = vmatpush1.msra.mxu0 0.0
  %256 = vmatprep.subr.mxu0 0.0
  %257 = vmatpush1.msra.mxu0 0.0
  %258 = vmatprep.subr.mxu0 0.0
  %259 = vmatpush1.msra.mxu0 0.0
  %260 = vmatprep.subr.mxu0 0.0
  %261 = vmatpush1.msra.mxu0 0.0
  %262 = vmatprep.subr.mxu0 0.0
  %263 = vmatpush1.msra.mxu0 0.0
  %264 = vmatprep.subr.mxu0 0.0
  %265 = vmatpush1.msra.mxu0 0.0
  %266 = vmatprep.subr.mxu0 0.0
  %267 = vmatpush1.msra.mxu0 %v234
  %268 = vmatprep.subr.mxu0 0.0
  %269 = vmatpush1.msra.mxu0 %v233
  %270 = vmatprep.subr.mxu0 0.0
  %271 = vmatpush1.msra.mxu0 %v232
  %272 = vmatprep.subr.mxu0 0.0
  %273 = vmatpush1.msra.mxu0 %v231
  %274 = vmatprep.subr.mxu0 0.0
  %275 = vmatpush2.msra.mxu0 0.0
  %276 = vmatprep.subr.mxu0 0.0
  %277 = vmatpush2.msra.mxu0 0.0
  %278 = vmatprep.subr.mxu0 0.0
  %279 = vmatpush2.msra.mxu0 0.0
  %280 = vmatprep.subr.mxu0 0.0
  %281 = vmatpush2.msra.mxu0 0.0
  %282 = vmatprep.subr.mxu0 0.0
  %283 = vmatpush2.msra.mxu0 0.0
  %284 = vmatprep.subr.mxu0 0.0
  %285 = vmatpush2.msra.mxu0 0.0
  %286 = vmatprep.subr.mxu0 0.0
  %287 = vmatpush2.msra.mxu0 0.0
  %288 = vmatprep.subr.mxu0 0.0
  %289 = vmatpush2.msra.mxu0 0.0
  %290 = vmatprep.subr.mxu0 0.0
  %291 = vmatpush2.msra.mxu0 0.0
  %292 = vmatprep.subr.mxu0 0.0
  %293 = vmatpush2.msra.mxu0 0.0
  %294 = vmatprep.subr.mxu0 0.0
  %295 = vmatpush2.msra.mxu0 0.0
  %296 = vmatprep.subr.mxu0 0.0
  %297 = vmatpush2.msra.mxu0 0.0
  %298 = vmatprep.subr.mxu0 0.0
  %299 = vmatpush2.msra.mxu0 0.0
  %300 = vmatprep.subr.mxu0 0.0
  %301 = vmatpush2.msra.mxu0 0.0
  %302 = vmatprep.subr.mxu0 0.0
  %303 = vmatpush2.msra.mxu0 0.0
  %304 = vmatprep.subr.mxu0 0.0
  %305 = vmatpush2.msra.mxu0 0.0
  %306 = vmatprep.mubr.f32.mxu0 0.0
  %307 = vmatmul.mubr.f32.gmra.mxu0 %v240
  %v308 = vpop.f32.mrf.mxu0
  %v309 = vadd.f32 %v236, %v308
  %v310 = vpop.f32.mrf.mxu0
  %311 = vdwg.mxu0
  %v312 = vmax.f32 %v309, 0.0
  %313 = vrot.lane.b32.xlu0 %v147, 92
  %v314 = vpop.permute.xlu0 %313
  %v316 = vmul.f32 %v312, %v314
  %vm317 = vcmask 25600
  %v318 = vsel %vm317, %v316, 0.0
  %319 = vadd.xlane.f32.xlu0 %v318
  %v320 = vpop.xlane.xlu0 %319
  %v321 = vadd.f32 %v320, %v147
  %v322 = vxor.u32 %v321, 2147483648
  %v323 = vmul.f32 %v322, 1.442695
  %v324 = vpow.pop %v323
  %v325 = vadd.f32 %v324, 1.0
  %v326 = vrcp.pop %v325
  %v327 = vmul.f32 1.0, %v326
  %329 = vrot.lane.b32.xlu0 %v327, 88
  %v330 = vpop.permute.xlu0 %329
  %vm332 = vcmask 1024
  %333 = vst.msk [vmem:[%s5] sm:$0x3] %vm332, %v330
  // Predicated region
  $region22: #{tpu_custom_call.1} parent=0 // pred_check
    _
  $region23: #{tpu_custom_call.1} parent=0 // pred_check_branch
    %335 = sbr.rel (0) target = $region25
  $region24: #{tpu_custom_call.1} parent=0 // pred_region
    _
  $region25: #{tpu_custom_call.1} parent=0 // pred_fallthru
    _
  // Predicated region
  $region26: #{tpu_custom_call.1} parent=0 // pred_check
    _
  $region27: #{tpu_custom_call.1} parent=0 // pred_check_branch
    %337 = sbr.rel (0) target = $region29
  $region28: #{tpu_custom_call.1} parent=0 // pred_region
    _
  $region29: #{tpu_custom_call.1} parent=0 // pred_fallthru
    _

</llo_original>
